<compile_context>
chip_gen: v7x
topology: tpu7x:2x2x1
jax: 0.10.0
libtpu: 0.0.40
codegen_flags: <defaults>
</compile_context>

<pallas_src>
import functools

import jax
import jax.numpy as jnp
from jax.experimental import pallas as pl
from jax.experimental.pallas import tpu as pltpu


def _linear_leaky_relu_kernel(x_ref, w_ref, b_ref, o_ref, acc_ref, *, negative_slope):
    # x_ref: (tm, tk)   w_ref: (tn, tk) in native (out_features, in_features) layout
    # b_ref: (1, tn)    o_ref: (tm, tn)  acc_ref: (tm, tn) f32 scratch
    k = pl.program_id(2)

    @pl.when(k == 0)
    def _():
        # Fold the bias into the accumulator init -> no VPU add in the epilogue.
        acc_ref[...] = jnp.broadcast_to(b_ref[...].astype(jnp.float32), acc_ref.shape)

    # x @ W^T for this tile: contract x axis 1 with W axis 1 (transposed-RHS matmul on
    # the MXU; no transpose is materialized).
    acc_ref[...] += jax.lax.dot_general(
        x_ref[...], w_ref[...],
        dimension_numbers=(((1,), (1,)), ((), ())),
        preferred_element_type=jnp.float32,
    )

    @pl.when(k == pl.num_programs(2) - 1)
    def _():
        acc = acc_ref[...]
        o_ref[...] = jnp.where(acc >= 0, acc, negative_slope * acc).astype(o_ref.dtype)


def _round_up(a, b):
    return (a + b - 1) // b * b


def _vmem_capacity_bytes():
    try:
        info = pltpu.get_tpu_info()
        return int(getattr(info, "vmem_capacity_bytes", 128 * 1024 * 1024))
    except Exception:
        return 128 * 1024 * 1024


def linear_leaky_relu(x, weight, bias, *, negative_slope=0.2):
    """x: (B, ...); weight: (out_features, in_features) PyTorch layout; bias: (out_features,).

    Returns (B, out_features) = LeakyReLU(x.reshape(B, -1) @ weight.T + bias, 0.2).
    """
    B = x.shape[0]
    x2d = x.reshape((B, -1))
    K = x2d.shape[1]
    N, Kw = weight.shape
    assert Kw == K, "weight in_features mismatch"

    x_itemsize = jnp.dtype(x2d.dtype).itemsize
    w_itemsize = jnp.dtype(weight.dtype).itemsize
    b_itemsize = jnp.dtype(bias.dtype).itemsize
    out_dtype = x2d.dtype
    out_itemsize = x_itemsize

    # Sublane minimum depends on dtype packing (f32: 8, bf16: 16, int8/fp8: 32 rows/vreg).
    sublane_min = {4: 8, 2: 16, 1: 32}.get(x_itemsize, 8)

    # --- per-generation tile budget ---
    vmem_bytes = _vmem_capacity_bytes()
    if vmem_bytes >= 100 * 1024 * 1024:           # v5e / v6e: 128 MiB physical VMEM
        vmem_limit = 64 * 1024 * 1024
        tile_budget = 48 * 1024 * 1024
        tn_cands = (1024, 512, 256, 128)
        tk_cands = (2048, 1024, 512, 256, 128)
    else:                                          # v7x: 64 MiB VMEM per TensorCore
        vmem_limit = 48 * 1024 * 1024
        tile_budget = 24 * 1024 * 1024
        tn_cands = (1024, 512, 256, 128)
        tk_cands = (1024, 512, 256, 128)

    # --- M (batch) handling: pad only activations, and only when unavoidable ---
    pad_m = 0
    M = B
    if B % sublane_min == 0:
        tm = next((c for c in (512, 256, 128, 64, 32, 16, 8) if B % c == 0), B)
    elif B <= 1024:
        tm = B                       # full-dim block: always legal, avoids any padding
    else:
        M = _round_up(B, sublane_min)
        pad_m = M - B
        x2d = jnp.pad(x2d, ((0, pad_m), (0, 0)))   # activations only, never the weight
        tm = next((c for c in (512, 256, 128, 64, 32, 16, 8) if M % c == 0), M)

    # --- N / K tiling: never pad the weight ---
    tn_opts = [c for c in tn_cands if N % c == 0] if N % 128 == 0 else [N]
    tk_opts = [c for c in tk_cands if K % c == 0] if K % 128 == 0 else [K]

    def footprint(tm_, tn_, tk_):
        # double-buffered inputs + double-buffered output + f32 accumulator scratch
        return (2 * tm_ * tk_ * x_itemsize
                + 2 * tn_ * tk_ * w_itemsize
                + 2 * tn_ * b_itemsize
                + 2 * tm_ * tn_ * out_itemsize
                + tm_ * tn_ * 4)

    best = None
    for tn_c in tn_opts:
        for tk_c in tk_opts:
            if footprint(tm, tn_c, tk_c) <= tile_budget:
                score = tn_c * tk_c
                if best is None or score > best[0]:
                    best = (score, tn_c, tk_c)
    if best is None:                 # tiny/unaligned dims: take the smallest available
        tn, tk = tn_opts[-1], tk_opts[-1]
    else:
        tn, tk = best[1], best[2]

    grid = (M // tm, N // tn, K // tk)

    b2d = bias.reshape((1, N))       # cheap reshape, no padding

    x_spec = pl.BlockSpec((tm, tk), lambda i, j, k: (i, k))
    w_spec = pl.BlockSpec((tn, tk), lambda i, j, k: (j, k))
    # Deepen the input pipeline when the K loop is long and per-step compute is tiny
    # (GEMV-like shapes) and VMEM has headroom (v5e/v6e only; keep 2-deep on v7x).
    if (K // tk) >= 8 and tm <= 16 and vmem_bytes >= 100 * 1024 * 1024:
        x_spec = pl.BlockSpec((tm, tk), lambda i, j, k: (i, k),
                              pipeline_mode=pl.Buffered(3))
        w_spec = pl.BlockSpec((tn, tk), lambda i, j, k: (j, k),
                              pipeline_mode=pl.Buffered(3))

    cost = pl.CostEstimate(
        flops=2 * M * K * N,
        transcendentals=0,
        bytes_accessed=(M * K * x_itemsize + N * K * w_itemsize
                        + N * b_itemsize + M * N * out_itemsize),
    )

    kernel = functools.partial(_linear_leaky_relu_kernel,
                               negative_slope=negative_slope)

    out = pl.pallas_call(
        kernel,
        out_shape=jax.ShapeDtypeStruct((M, N), out_dtype),
        grid_spec=pltpu.PrefetchScalarGridSpec(
            num_scalar_prefetch=0,
            grid=grid,
            in_specs=[
                x_spec,                                         # activations (tm, tk)
                w_spec,                                         # weight (tn, tk), native layout
                pl.BlockSpec((1, tn), lambda i, j, k: (0, j)),  # bias row
            ],
            out_specs=pl.BlockSpec((tm, tn), lambda i, j, k: (i, j)),
            scratch_shapes=[pltpu.VMEM((tm, tn), jnp.float32)],
        ),
        compiler_params=pltpu.CompilerParams(
            dimension_semantics=("parallel", "parallel", "arbitrary"),
            vmem_limit_bytes=vmem_limit,
        ),
        cost_estimate=cost,
    )(x2d, weight, b2d)

    return out if pad_m == 0 else out[:B]


if __name__ == "__main__":
    # Module config: in_features = 4*16*16 (flattened NCHW input), out_features = 32
    batch, C, H, W = 2, 4, 16, 16
    in_features = C * H * W
    out_features = 32

    key = jax.random.PRNGKey(0)
    kx, kw, kb = jax.random.split(key, 3)

    x = jax.random.normal(kx, (batch, C, H, W), dtype=jnp.float32)
    # Deterministic init mimicking nn.Linear's uniform(-1/sqrt(in), 1/sqrt(in))
    bound = 1.0 / jnp.sqrt(jnp.float32(in_features))
    weight = jax.random.uniform(kw, (out_features, in_features),
                                dtype=jnp.float32, minval=-bound, maxval=bound)
    bias = jax.random.uniform(kb, (out_features,),
                              dtype=jnp.float32, minval=-bound, maxval=bound)

    fn = jax.jit(linear_leaky_relu)
    out = jax.block_until_ready(fn(x, weight, bias))

    # Pure-JAX reference check
    ref = x.reshape((batch, -1)) @ weight.T + bias
    ref = jnp.where(ref >= 0, ref, 0.2 * ref)
    assert out.shape == (batch, out_features)
    assert jnp.allclose(out, ref, atol=1e-5, rtol=1e-5), "mismatch vs reference"

    print("KERNEL_OK")
</pallas_src>

<mosaic_0001>
module attributes {stable_mosaic.version = 11 : i64} {
  func.func @_linear_leaky_relu_kernel(%arg0: i32, %arg1: i32, %arg2: i32, %arg3: memref<2x1024xf32, #tpu.memory_space<vmem>>, %arg4: memref<32x1024xf32, #tpu.memory_space<vmem>>, %arg5: memref<1x32xf32, #tpu.memory_space<vmem>>, %arg6: memref<2x32xf32, #tpu.memory_space<vmem>>, %arg7: memref<2x32xf32, #tpu.memory_space<vmem>>) attributes {dimension_semantics = [#tpu.dimension_semantics<parallel>, #tpu.dimension_semantics<parallel>, #tpu.dimension_semantics<arbitrary>], iteration_bounds = array<i64: 1, 1, 1>, scalar_prefetch = 0 : i64, scratch_operands = 1 : i64, tpu.core_type = #tpu.core_type<tc>, window_params = [{transform_indices = @transform_0, window_bounds = array<i64: 2, 1024>}, {transform_indices = @transform_1, window_bounds = array<i64: 32, 1024>}, {transform_indices = @transform_2, window_bounds = array<i64: 1, 32>}, {transform_indices = @transform_3, window_bounds = array<i64: 2, 32>}]} {
    %c0_i32 = arith.constant 0 : i32
    %0 = arith.cmpi eq, %arg2, %c0_i32 : i32
    %1 = arith.extui %0 : i1 to i32
    %c0_i32_0 = arith.constant 0 : i32
    %2 = arith.cmpi ne, %1, %c0_i32_0 : i32
    scf.if %2 {
      %c0_10 = arith.constant 0 : index
      %c0_11 = arith.constant 0 : index
      %12 = vector.load %arg5[%c0_10, %c0_11] : memref<1x32xf32, #tpu.memory_space<vmem>>, vector<1x32xf32>
      %13 = vector.shape_cast %12 : vector<1x32xf32> to vector<1x32xf32>
      %14 = vector.broadcast %13 : vector<1x32xf32> to vector<2x32xf32>
      %c0_12 = arith.constant 0 : index
      %c0_13 = arith.constant 0 : index
      %15 = vector.load %arg7[%c0_12, %c0_13] : memref<2x32xf32, #tpu.memory_space<vmem>>, vector<2x32xf32>
      tpu.vector_store %arg7[%c0_12, %c0_13], %14 {strides = array<i32>} : memref<2x32xf32, #tpu.memory_space<vmem>>, vector<2x32xf32>,
    } else {
    }
    %c0 = arith.constant 0 : index
    %c0_1 = arith.constant 0 : index
    %3 = vector.load %arg7[%c0, %c0_1] : memref<2x32xf32, #tpu.memory_space<vmem>>, vector<2x32xf32>
    %c0_2 = arith.constant 0 : index
    %c0_3 = arith.constant 0 : index
    %4 = vector.load %arg3[%c0_2, %c0_3] : memref<2x1024xf32, #tpu.memory_space<vmem>>, vector<2x1024xf32>
    %c0_4 = arith.constant 0 : index
    %c0_5 = arith.constant 0 : index
    %5 = vector.load %arg4[%c0_4, %c0_5] : memref<32x1024xf32, #tpu.memory_space<vmem>>, vector<32x1024xf32>
    %cst = arith.constant dense<0.000000e+00> : vector<2x32xf32>
    %6 = tpu.matmul %4, %5, %cst {dimension_numbers = #tpu.dot_dimension_numbers<[1], [1], [0], [0], [0, 0, 1, 0], [], []>} : vector<2x1024xf32>, vector<32x1024xf32>, vector<2x32xf32> -> vector<2x32xf32>
    %7 = arith.addf %3, %6 : vector<2x32xf32>
    %c0_6 = arith.constant 0 : index
    %c0_7 = arith.constant 0 : index
    %8 = vector.load %arg7[%c0_6, %c0_7] : memref<2x32xf32, #tpu.memory_space<vmem>>, vector<2x32xf32>
    tpu.vector_store %arg7[%c0_6, %c0_7], %7 {strides = array<i32>} : memref<2x32xf32, #tpu.memory_space<vmem>>, vector<2x32xf32>,
    %c0_i32_8 = arith.constant 0 : i32
    %9 = arith.cmpi eq, %arg2, %c0_i32_8 : i32
    %10 = arith.extui %9 : i1 to i32
    %c0_i32_9 = arith.constant 0 : i32
    %11 = arith.cmpi ne, %10, %c0_i32_9 : i32
    scf.if %11 {
      %c0_10 = arith.constant 0 : index
      %c0_11 = arith.constant 0 : index
      %12 = vector.load %arg7[%c0_10, %c0_11] : memref<2x32xf32, #tpu.memory_space<vmem>>, vector<2x32xf32>
      %cst_12 = arith.constant 0.000000e+00 : f32
      %13 = vector.broadcast %cst_12 : f32 to vector<2x32xf32>
      %14 = arith.cmpf oge, %12, %13 : vector<2x32xf32>
      %cst_13 = arith.constant 2.000000e-01 : f32
      %15 = vector.broadcast %cst_13 : f32 to vector<2x32xf32>
      %16 = arith.mulf %15, %12 : vector<2x32xf32>
      %17 = arith.select %14, %12, %16 : vector<2x32xi1>, vector<2x32xf32>
      %c0_14 = arith.constant 0 : index
      %c0_15 = arith.constant 0 : index
      %18 = vector.load %arg6[%c0_14, %c0_15] : memref<2x32xf32, #tpu.memory_space<vmem>>, vector<2x32xf32>
      tpu.vector_store %arg6[%c0_14, %c0_15], %17 {strides = array<i32>} : memref<2x32xf32, #tpu.memory_space<vmem>>, vector<2x32xf32>,
    } else {
    }
    return
  }
  func.func @transform_0(%arg0: i32, %arg1: i32, %arg2: i32) -> (i32, i32) {
    %c0_i32 = arith.constant 0 : i32
    return %arg0, %arg2 : i32, i32
  }
  func.func @transform_1(%arg0: i32, %arg1: i32, %arg2: i32) -> (i32, i32) {
    %c0_i32 = arith.constant 0 : i32
    return %arg1, %arg2 : i32, i32
  }
  func.func @transform_2(%arg0: i32, %arg1: i32, %arg2: i32) -> (i32, i32) {
    %c0_i32 = arith.constant 0 : i32
    %c0_i32_0 = arith.constant 0 : i32
    return %c0_i32, %arg1 : i32, i32
  }
  func.func @transform_3(%arg0: i32, %arg1: i32, %arg2: i32) -> (i32, i32) {
    %c0_i32 = arith.constant 0 : i32
    return %arg0, %arg1 : i32, i32
  }
}

</mosaic_0001>

<llo_original>
// kernel: linear_leaky_relu.1
$region0: #{linear_leaky_relu.1}
  #allocation0 [shape = 'u32[]', space=smem, size = 0x4, offset = 0x4, fixed_abs, tag = 'smem constant byte address 0x4 - core index']
  #allocation1 [shape = 'u32[144,128]{1,0:T(1,128)}', space=vmem, size = 0x12000, scoped, tag = 'internal scratch']
  #allocation2 [shape = 'f32[2,32]{1,0:T(2,128)}', space=vmem, size = 0x400, scoped, tag = 'scratch operand']
  %s0 = inlined_call_operand.hbm [shape: f32[2,1024], index: 0, kind: input, shape index: {}]
  %s1 = inlined_call_operand.hbm [shape: f32[32,1024], index: 1, kind: input, shape index: {}]
  %s2 = inlined_call_operand.hbm [shape: f32[1,32], index: 2, kind: input, shape index: {}]
  %s3 = inlined_call_operand.hbm [shape: f32[2,32], index: 3, kind: output, shape index: {}]
  %s4 = sld [smem:[#allocation0]]
  $region42: #{linear_leaky_relu.1} parent=0
    _
  %s6 = ssub.s32 1, %s4
  %s7 = scalar_select 0, %s6, %s4
  $region1: #{linear_leaky_relu.1} parent=0
    #allocation3 [shape = 'u8[8192]{0}', space=vmem, size = 0x2000, scoped, tag = 'input window, operand 0, single buffered']
    #allocation4 [shape = 's32[1]{0}', space=sflag, size = 0x4, scoped, tag = 'scoped memory for linear_leaky_relu.1']
    #allocation5 [shape = 's32[1]{0}', space=sflag, size = 0x4, scoped, tag = 'scoped memory for linear_leaky_relu.1']
    #allocation6 [shape = 'u8[131072]{0}', space=vmem, size = 0x20000, scoped, tag = 'input window, operand 1, single buffered']
    #allocation7 [shape = 's32[1]{0}', space=sflag, size = 0x4, scoped, tag = 'scoped memory for linear_leaky_relu.1']
    #allocation8 [shape = 'u8[512]{0}', space=vmem, size = 0x400, scoped, tag = 'input window, operand 2, single buffered']
    #allocation9 [shape = 'u8[1024]{0}', space=vmem, size = 0x400, scoped, tag = 'output window, operand 0, single buffered']
    %8 = vsyncpa [#allocation4], 0
    %9 = vsyncpa [#allocation7], 0
    %10 = vsyncpa [#allocation5], 0
    // Predicated region
    $region2: #{linear_leaky_relu.1} parent=1 // pred_check
      _
    $region3: #{linear_leaky_relu.1} parent=1 // pred_check_branch
      %12 = sbr.rel (0) target = $region5
    $region4: #{linear_leaky_relu.1} parent=1 // pred_region
      %s14 = ssub.s32 256, 256
      %15 = vsyncadd [#allocation4], %s14
      %s17 = sshll.u32 [#allocation3], 4
      %s18 = int_to_ptr.vmem [resolvable:$true] %s17
      %20 = dma.hbm_to_vmem [thread:$0]  %s0, 256, %s18, [#allocation4]
    $region5: #{linear_leaky_relu.1} parent=1 // pred_fallthru
      _
    // Predicated region
    $region6: #{linear_leaky_relu.1} parent=1 // pred_check
      _
    $region7: #{linear_leaky_relu.1} parent=1 // pred_check_branch
      %22 = sbr.rel (0) target = $region9
    $region8: #{linear_leaky_relu.1} parent=1 // pred_region
      %s24 = ssub.s32 4096, 4096
      %25 = vsyncadd [#allocation7], %s24
      %s26 = sshll.u32 [#allocation6], 4
      %s27 = int_to_ptr.vmem [resolvable:$true] %s26
      %32 = dma.hbm_to_vmem [thread:$0]  %s1, 4096, %s27, [#allocation7], 1024, 1024, 64
    $region9: #{linear_leaky_relu.1} parent=1 // pred_fallthru
      _
    // Predicated region
    $region10: #{linear_leaky_relu.1} parent=1 // pred_check
      _
    $region11: #{linear_leaky_relu.1} parent=1 // pred_check_branch
      %34 = sbr.rel (0) target = $region13
    $region12: #{linear_leaky_relu.1} parent=1 // pred_region
      %s36 = ssub.s32 16, 16
      %37 = vsyncadd [#allocation7], %s36
      %s39 = sshll.u32 [#allocation8], 4
      %s40 = int_to_ptr.vmem [resolvable:$true] %s39
      %42 = dma.hbm_to_vmem [thread:$0]  %s2, 16, %s40, [#allocation7]
    $region13: #{linear_leaky_relu.1} parent=1 // pred_fallthru
      _
    // Predicated region
    $region14: #{linear_leaky_relu.1} parent=1 // pred_check
      _
    $region15: #{linear_leaky_relu.1} parent=1 // pred_check_branch
      %44 = sbr.rel (0) target = $region17
    $region16: #{linear_leaky_relu.1} parent=1 // pred_region
      %45 = dma.done [#allocation4], 256
    $region17: #{linear_leaky_relu.1} parent=1 // pred_fallthru
      _
    // Predicated region
    $region18: #{linear_leaky_relu.1} parent=1 // pred_check
      _
    $region19: #{linear_leaky_relu.1} parent=1 // pred_check_branch
      %47 = sbr.rel (0) target = $region21
    $region20: #{linear_leaky_relu.1} parent=1 // pred_region
      %48 = dma.done [#allocation7], 4096
    $region21: #{linear_leaky_relu.1} parent=1 // pred_fallthru
      _
    // Predicated region
    $region22: #{linear_leaky_relu.1} parent=1 // pred_check
      _
    $region23: #{linear_leaky_relu.1} parent=1 // pred_check_branch
      %50 = sbr.rel (0) target = $region25
    $region24: #{linear_leaky_relu.1} parent=1 // pred_region
      %51 = dma.done [#allocation7], 16
    $region25: #{linear_leaky_relu.1} parent=1 // pred_fallthru
      _
    %p52 = scmp.eq.s32.totalorder 0, 0
    // Predicated region
    $region26: #{linear_leaky_relu.1} parent=1 // pred_check
      %p53 = pneg %p52
    $region27: #{linear_leaky_relu.1} parent=1 // pred_check_branch
      %55 = sbr.rel (%p53) target = $region29
    $region28: #{linear_leaky_relu.1} parent=1 // pred_region
      %v56 = vld [vmem:[#allocation8] sm:$0x1]
      %v58 = vlaneseq
      %v59 = vshrl.u32 %v58, 7
      %v60 = vsub.s32 0, %v59
      %v61 = vrot.slane %v56, %v60
      %vm63 = vcmask 254976
      %64 = vst.msk [vmem:[#allocation2] sm:$0x3] %vm63, %v61
    $region29: #{linear_leaky_relu.1} parent=1 // pred_fallthru
      _
    %v65 = vld [vmem:[#allocation2] sm:$0x3]
    %v66 = vld [vmem:[#allocation3] sm:$0xff]
    %v67 = vld [vmem:[#allocation3 + $0x8] sm:$0xff]
    %v68 = vld [vmem:[#allocation6] sm:$0xff]
    %v69 = vld [vmem:[#allocation6 + $0x8] sm:$0xff]
    %v70 = vld [vmem:[#allocation6 + $0x10] sm:$0xff]
    %v71 = vld [vmem:[#allocation6 + $0x18] sm:$0xff]
    %v72 = vld [vmem:[#allocation6 + $0x20] sm:$0xff]
    %v73 = vld [vmem:[#allocation6 + $0x28] sm:$0xff]
    %v74 = vld [vmem:[#allocation6 + $0x30] sm:$0xff]
    %v75 = vld [vmem:[#allocation6 + $0x38] sm:$0xff]
    %v76 = vld [vmem:[#allocation6 + $0x40] sm:$0xff]
    %v77 = vld [vmem:[#allocation6 + $0x48] sm:$0xff]
    %v78 = vld [vmem:[#allocation6 + $0x50] sm:$0xff]
    %v79 = vld [vmem:[#allocation6 + $0x58] sm:$0xff]
    %v80 = vld [vmem:[#allocation6 + $0x60] sm:$0xff]
    %v81 = vld [vmem:[#allocation6 + $0x68] sm:$0xff]
    %v82 = vld [vmem:[#allocation6 + $0x70] sm:$0xff]
    %v83 = vld [vmem:[#allocation6 + $0x78] sm:$0xff]
    %v84 = vld [vmem:[#allocation6 + $0x80] sm:$0xff]
    %v85 = vld [vmem:[#allocation6 + $0x88] sm:$0xff]
    %v86 = vld [vmem:[#allocation6 + $0x90] sm:$0xff]
    %v87 = vld [vmem:[#allocation6 + $0x98] sm:$0xff]
    %v88 = vld [vmem:[#allocation6 + $0xa0] sm:$0xff]
    %v89 = vld [vmem:[#allocation6 + $0xa8] sm:$0xff]
    %v90 = vld [vmem:[#allocation6 + $0xb0] sm:$0xff]
    %v91 = vld [vmem:[#allocation6 + $0xb8] sm:$0xff]
    %v92 = vld [vmem:[#allocation6 + $0xc0] sm:$0xff]
    %v93 = vld [vmem:[#allocation6 + $0xc8] sm:$0xff]
    %v94 = vld [vmem:[#allocation6 + $0xd0] sm:$0xff]
    %v95 = vld [vmem:[#allocation6 + $0xd8] sm:$0xff]
    %v96 = vld [vmem:[#allocation6 + $0xe0] sm:$0xff]
    %v97 = vld [vmem:[#allocation6 + $0xe8] sm:$0xff]
    %v98 = vld [vmem:[#allocation6 + $0xf0] sm:$0xff]
    %v99 = vld [vmem:[#allocation6 + $0xf8] sm:$0xff]
    %v102 = vcombine.high %v66, %v66
    %v104 = vunpack.c.l.s4 1983009808
    %v105 = vunpack.c.0.s8 %v104
    %v106 = vlaneseq
    %v107 = vshrl.u32 %v106, 7
    %v108 = vsub.s32 %v105, %v107
    %v109 = vrot.slane %v66, %v108
    %v111 = vunpack.c.l.s4 1983009808
    %v112 = vunpack.c.0.s8 %v111
    %v113 = vlaneseq
    %v114 = vshrl.u32 %v113, 7
    %v115 = vsub.s32 %v112, %v114
    %v116 = vrot.slane %v102, %v115
    %v117 = vcombine.high %v109, %v109
    %v118 = vcombine.high %v116, %v116
    %v119 = vcombine.high %v67, %v67
    %v121 = vunpack.c.l.s4 1983009808
    %v122 = vunpack.c.0.s8 %v121
    %v123 = vlaneseq
    %v124 = vshrl.u32 %v123, 7
    %v125 = vsub.s32 %v122, %v124
    %v126 = vrot.slane %v67, %v125
    %v128 = vunpack.c.l.s4 1983009808
    %v129 = vunpack.c.0.s8 %v128
    %v130 = vlaneseq
    %v131 = vshrl.u32 %v130, 7
    %v132 = vsub.s32 %v129, %v131
    %v133 = vrot.slane %v119, %v132
    %v134 = vcombine.high %v126, %v126
    %v135 = vcombine.high %v133, %v133
    %144 = vmatprep.subr.mxu0 %v69
    %145 = vmatpush1.xpose.msra.mxu0 %v68
    %146 = vmatprep.subr.mxu0 %v77
    %147 = vmatpush1.xpose.msra.mxu0 %v76
    %148 = vmatprep.subr.mxu0 %v85
    %149 = vmatpush1.xpose.msra.mxu0 %v84
    %150 = vmatprep.subr.mxu0 %v93
    %151 = vmatpush1.xpose.msra.mxu0 %v92
    %152 = vmatprep.subr.mxu0 0.0
    %153 = vmatpush1.xpose.msra.mxu0 0.0
    %154 = vmatprep.subr.mxu0 0.0
    %155 = vmatpush1.xpose.msra.mxu0 0.0
    %156 = vmatprep.subr.mxu0 0.0
    %157 = vmatpush1.xpose.msra.mxu0 0.0
    %158 = vmatprep.subr.mxu0 0.0
    %159 = vmatpush1.xpose.msra.mxu0 0.0
    %160 = vmatprep.subr.mxu0 0.0
    %161 = vmatpush1.xpose.msra.mxu0 0.0
    %162 = vmatprep.subr.mxu0 0.0
    %163 = vmatpush1.xpose.msra.mxu0 0.0
    %164 = vmatprep.subr.mxu0 0.0
    %165 = vmatpush1.xpose.msra.mxu0 0.0
    %166 = vmatprep.subr.mxu0 0.0
    %167 = vmatpush1.xpose.msra.mxu0 0.0
    %168 = vmatprep.subr.mxu0 0.0
    %169 = vmatpush1.xpose.msra.mxu0 0.0
    %170 = vmatprep.subr.mxu0 0.0
    %171 = vmatpush1.xpose.msra.mxu0 0.0
    %172 = vmatprep.subr.mxu0 0.0
    %173 = vmatpush1.xpose.msra.mxu0 0.0
    %174 = vmatprep.subr.mxu0 0.0
    %175 = vmatpush1.xpose.msra.mxu0 0.0
    %176 = vmatprep.subr.mxu0 0.0
    %177 = vmatpush1.xpose.msra.mxu0 0.0
    %178 = vmatprep.subr.mxu0 0.0
    %179 = vmatpush1.xpose.msra.mxu0 0.0
    %180 = vmatprep.subr.mxu0 0.0
    %181 = vmatpush1.xpose.msra.mxu0 0.0
    %182 = vmatprep.subr.mxu0 0.0
    %183 = vmatpush1.xpose.msra.mxu0 0.0
    %184 = vmatprep.subr.mxu0 0.0
    %185 = vmatpush1.xpose.msra.mxu0 0.0
    %186 = vmatprep.subr.mxu0 0.0
    %187 = vmatpush1.xpose.msra.mxu0 0.0
    %188 = vmatprep.subr.mxu0 0.0
    %189 = vmatpush1.xpose.msra.mxu0 0.0
    %190 = vmatprep.subr.mxu0 0.0
    %191 = vmatpush1.xpose.msra.mxu0 0.0
    %192 = vmatprep.subr.mxu0 0.0
    %193 = vmatpush1.xpose.msra.mxu0 0.0
    %194 = vmatprep.subr.mxu0 0.0
    %195 = vmatpush1.xpose.msra.mxu0 0.0
    %196 = vmatprep.subr.mxu0 0.0
    %197 = vmatpush1.xpose.msra.mxu0 0.0
    %198 = vmatprep.subr.mxu0 0.0
    %199 = vmatpush1.xpose.msra.mxu0 0.0
    %200 = vmatprep.subr.mxu0 0.0
    %201 = vmatpush1.xpose.msra.mxu0 0.0
    %202 = vmatprep.subr.mxu0 0.0
    %203 = vmatpush1.xpose.msra.mxu0 0.0
    %204 = vmatprep.subr.mxu0 0.0
    %205 = vmatpush1.xpose.msra.mxu0 0.0
    %206 = vmatprep.subr.mxu0 0.0
    %207 = vmatpush1.xpose.msra.mxu0 0.0
    %208 = vmatprep.mubr.f32.mxu0 %v117
    %209 = vmatmul.mubr.f32.gmra.mrb[0].mxu0 %v109
    %v210 = vpop.f32.mrb[0].mxu0
    %v211 = vadd.f32 0.0, %v210
    %v212 = vpop.f32.mrb[0].mxu0
    %213 = vdwg.mxu0
    %214 = vmatprep.subr.mxu0 %v71
    %215 = vmatpush1.xpose.msra.mxu0 %v70
    %216 = vmatprep.subr.mxu0 %v79
    %217 = vmatpush1.xpose.msra.mxu0 %v78
    %218 = vmatprep.subr.mxu0 %v87
    %219 = vmatpush1.xpose.msra.mxu0 %v86
    %220 = vmatprep.subr.mxu0 %v95
    %221 = vmatpush1.xpose.msra.mxu0 %v94
    %222 = vmatprep.subr.mxu0 0.0
    %223 = vmatpush1.xpose.msra.mxu0 0.0
    %224 = vmatprep.subr.mxu0 0.0
    %225 = vmatpush1.xpose.msra.mxu0 0.0
    %226 = vmatprep.subr.mxu0 0.0
    %227 = vmatpush1.xpose.msra.mxu0 0.0
    %228 = vmatprep.subr.mxu0 0.0
    %229 = vmatpush1.xpose.msra.mxu0 0.0
    %230 = vmatprep.subr.mxu0 0.0
    %231 = vmatpush1.xpose.msra.mxu0 0.0
    %232 = vmatprep.subr.mxu0 0.0
    %233 = vmatpush1.xpose.msra.mxu0 0.0
    %234 = vmatprep.subr.mxu0 0.0
    %235 = vmatpush1.xpose.msra.mxu0 0.0
    %236 = vmatprep.subr.mxu0 0.0
    %237 = vmatpush1.xpose.msra.mxu0 0.0
    %238 = vmatprep.subr.mxu0 0.0
    %239 = vmatpush1.xpose.msra.mxu0 0.0
    %240 = vmatprep.subr.mxu0 0.0
    %241 = vmatpush1.xpose.msra.mxu0 0.0
    %242 = vmatprep.subr.mxu0 0.0
    %243 = vmatpush1.xpose.msra.mxu0 0.0
    %244 = vmatprep.subr.mxu0 0.0
    %245 = vmatpush1.xpose.msra.mxu0 0.0
    %246 = vmatprep.subr.mxu0 0.0
    %247 = vmatpush1.xpose.msra.mxu0 0.0
    %248 = vmatprep.subr.mxu0 0.0
    %249 = vmatpush1.xpose.msra.mxu0 0.0
    %250 = vmatprep.subr.mxu0 0.0
    %251 = vmatpush1.xpose.msra.mxu0 0.0
    %252 = vmatprep.subr.mxu0 0.0
    %253 = vmatpush1.xpose.msra.mxu0 0.0
    %254 = vmatprep.subr.mxu0 0.0
    %255 = vmatpush1.xpose.msra.mxu0 0.0
    %256 = vmatprep.subr.mxu0 0.0
    %257 = vmatpush1.xpose.msra.mxu0 0.0
    %258 = vmatprep.subr.mxu0 0.0
    %259 = vmatpush1.xpose.msra.mxu0 0.0
    %260 = vmatprep.subr.mxu0 0.0
    %261 = vmatpush1.xpose.msra.mxu0 0.0
    %262 = vmatprep.subr.mxu0 0.0
    %263 = vmatpush1.xpose.msra.mxu0 0.0
    %264 = vmatprep.subr.mxu0 0.0
    %265 = vmatpush1.xpose.msra.mxu0 0.0
    %266 = vmatprep.subr.mxu0 0.0
    %267 = vmatpush1.xpose.msra.mxu0 0.0
    %268 = vmatprep.subr.mxu0 0.0
    %269 = vmatpush1.xpose.msra.mxu0 0.0
    %270 = vmatprep.subr.mxu0 0.0
    %271 = vmatpush1.xpose.msra.mxu0 0.0
    %272 = vmatprep.subr.mxu0 0.0
    %273 = vmatpush1.xpose.msra.mxu0 0.0
    %274 = vmatprep.subr.mxu0 0.0
    %275 = vmatpush1.xpose.msra.mxu0 0.0
    %276 = vmatprep.subr.mxu0 0.0
    %277 = vmatpush1.xpose.msra.mxu0 0.0
    %278 = vmatprep.mubr.f32.mxu0 %v118
    %279 = vmatmul.mubr.f32.gmra.mrb[0].mxu0 %v116
    %v280 = vpop.f32.mrb[0].mxu0
    %v281 = vadd.f32 %v211, %v280
    %v282 = vpop.f32.mrb[0].mxu0
    %283 = vdwg.mxu0
    %284 = vmatprep.subr.mxu0 %v73
    %285 = vmatpush1.xpose.msra.mxu0 %v72
    %286 = vmatprep.subr.mxu0 %v81
    %287 = vmatpush1.xpose.msra.mxu0 %v80
    %288 = vmatprep.subr.mxu0 %v89
    %289 = vmatpush1.xpose.msra.mxu0 %v88
    %290 = vmatprep.subr.mxu0 %v97
    %291 = vmatpush1.xpose.msra.mxu0 %v96
    %292 = vmatprep.subr.mxu0 0.0
    %293 = vmatpush1.xpose.msra.mxu0 0.0
    %294 = vmatprep.subr.mxu0 0.0
    %295 = vmatpush1.xpose.msra.mxu0 0.0
    %296 = vmatprep.subr.mxu0 0.0
    %297 = vmatpush1.xpose.msra.mxu0 0.0
    %298 = vmatprep.subr.mxu0 0.0
    %299 = vmatpush1.xpose.msra.mxu0 0.0
    %300 = vmatprep.subr.mxu0 0.0
    %301 = vmatpush1.xpose.msra.mxu0 0.0
    %302 = vmatprep.subr.mxu0 0.0
    %303 = vmatpush1.xpose.msra.mxu0 0.0
    %304 = vmatprep.subr.mxu0 0.0
    %305 = vmatpush1.xpose.msra.mxu0 0.0
    %306 = vmatprep.subr.mxu0 0.0
    %307 = vmatpush1.xpose.msra.mxu0 0.0
    %308 = vmatprep.subr.mxu0 0.0
    %309 = vmatpush1.xpose.msra.mxu0 0.0
    %310 = vmatprep.subr.mxu0 0.0
    %311 = vmatpush1.xpose.msra.mxu0 0.0
    %312 = vmatprep.subr.mxu0 0.0
    %313 = vmatpush1.xpose.msra.mxu0 0.0
    %314 = vmatprep.subr.mxu0 0.0
    %315 = vmatpush1.xpose.msra.mxu0 0.0
    %316 = vmatprep.subr.mxu0 0.0
    %317 = vmatpush1.xpose.msra.mxu0 0.0
    %318 = vmatprep.subr.mxu0 0.0
    %319 = vmatpush1.xpose.msra.mxu0 0.0
    %320 = vmatprep.subr.mxu0 0.0
    %321 = vmatpush1.xpose.msra.mxu0 0.0
    %322 = vmatprep.subr.mxu0 0.0
    %323 = vmatpush1.xpose.msra.mxu0 0.0
    %324 = vmatprep.subr.mxu0 0.0
    %325 = vmatpush1.xpose.msra.mxu0 0.0
    %326 = vmatprep.subr.mxu0 0.0
    %327 = vmatpush1.xpose.msra.mxu0 0.0
    %328 = vmatprep.subr.mxu0 0.0
    %329 = vmatpush1.xpose.msra.mxu0 0.0
    %330 = vmatprep.subr.mxu0 0.0
    %331 = vmatpush1.xpose.msra.mxu0 0.0
    %332 = vmatprep.subr.mxu0 0.0
    %333 = vmatpush1.xpose.msra.mxu0 0.0
    %334 = vmatprep.subr.mxu0 0.0
    %335 = vmatpush1.xpose.msra.mxu0 0.0
    %336 = vmatprep.subr.mxu0 0.0
    %337 = vmatpush1.xpose.msra.mxu0 0.0
    %338 = vmatprep.subr.mxu0 0.0
    %339 = vmatpush1.xpose.msra.mxu0 0.0
    %340 = vmatprep.subr.mxu0 0.0
    %341 = vmatpush1.xpose.msra.mxu0 0.0
    %342 = vmatprep.subr.mxu0 0.0
    %343 = vmatpush1.xpose.msra.mxu0 0.0
    %344 = vmatprep.subr.mxu0 0.0
    %345 = vmatpush1.xpose.msra.mxu0 0.0
    %346 = vmatprep.subr.mxu0 0.0
    %347 = vmatpush1.xpose.msra.mxu0 0.0
    %348 = vmatprep.mubr.f32.mxu0 %v134
    %349 = vmatmul.mubr.f32.gmra.mrb[0].mxu0 %v126
    %v350 = vpop.f32.mrb[0].mxu0
    %v351 = vadd.f32 %v281, %v350
    %v352 = vpop.f32.mrb[0].mxu0
    %353 = vdwg.mxu0
    %354 = vmatprep.subr.mxu0 %v75
    %355 = vmatpush1.xpose.msra.mxu0 %v74
    %356 = vmatprep.subr.mxu0 %v83
    %357 = vmatpush1.xpose.msra.mxu0 %v82
    %358 = vmatprep.subr.mxu0 %v91
    %359 = vmatpush1.xpose.msra.mxu0 %v90
    %360 = vmatprep.subr.mxu0 %v99
    %361 = vmatpush1.xpose.msra.mxu0 %v98
    %362 = vmatprep.subr.mxu0 0.0
    %363 = vmatpush1.xpose.msra.mxu0 0.0
    %364 = vmatprep.subr.mxu0 0.0
    %365 = vmatpush1.xpose.msra.mxu0 0.0
    %366 = vmatprep.subr.mxu0 0.0
    %367 = vmatpush1.xpose.msra.mxu0 0.0
    %368 = vmatprep.subr.mxu0 0.0
    %369 = vmatpush1.xpose.msra.mxu0 0.0
    %370 = vmatprep.subr.mxu0 0.0
    %371 = vmatpush1.xpose.msra.mxu0 0.0
    %372 = vmatprep.subr.mxu0 0.0
    %373 = vmatpush1.xpose.msra.mxu0 0.0
    %374 = vmatprep.subr.mxu0 0.0
    %375 = vmatpush1.xpose.msra.mxu0 0.0
    %376 = vmatprep.subr.mxu0 0.0
    %377 = vmatpush1.xpose.msra.mxu0 0.0
    %378 = vmatprep.subr.mxu0 0.0
    %379 = vmatpush1.xpose.msra.mxu0 0.0
    %380 = vmatprep.subr.mxu0 0.0
    %381 = vmatpush1.xpose.msra.mxu0 0.0
    %382 = vmatprep.subr.mxu0 0.0
    %383 = vmatpush1.xpose.msra.mxu0 0.0
    %384 = vmatprep.subr.mxu0 0.0
    %385 = vmatpush1.xpose.msra.mxu0 0.0
    %386 = vmatprep.subr.mxu0 0.0
    %387 = vmatpush1.xpose.msra.mxu0 0.0
    %388 = vmatprep.subr.mxu0 0.0
    %389 = vmatpush1.xpose.msra.mxu0 0.0
    %390 = vmatprep.subr.mxu0 0.0
    %391 = vmatpush1.xpose.msra.mxu0 0.0
    %392 = vmatprep.subr.mxu0 0.0
    %393 = vmatpush1.xpose.msra.mxu0 0.0
    %394 = vmatprep.subr.mxu0 0.0
    %395 = vmatpush1.xpose.msra.mxu0 0.0
    %396 = vmatprep.subr.mxu0 0.0
    %397 = vmatpush1.xpose.msra.mxu0 0.0
    %398 = vmatprep.subr.mxu0 0.0
    %399 = vmatpush1.xpose.msra.mxu0 0.0
    %400 = vmatprep.subr.mxu0 0.0
    %401 = vmatpush1.xpose.msra.mxu0 0.0
    %402 = vmatprep.subr.mxu0 0.0
    %403 = vmatpush1.xpose.msra.mxu0 0.0
    %404 = vmatprep.subr.mxu0 0.0
    %405 = vmatpush1.xpose.msra.mxu0 0.0
    %406 = vmatprep.subr.mxu0 0.0
    %407 = vmatpush1.xpose.msra.mxu0 0.0
    %408 = vmatprep.subr.mxu0 0.0
    %409 = vmatpush1.xpose.msra.mxu0 0.0
    %410 = vmatprep.subr.mxu0 0.0
    %411 = vmatpush1.xpose.msra.mxu0 0.0
    %412 = vmatprep.subr.mxu0 0.0
    %413 = vmatpush1.xpose.msra.mxu0 0.0
    %414 = vmatprep.subr.mxu0 0.0
    %415 = vmatpush1.xpose.msra.mxu0 0.0
    %416 = vmatprep.subr.mxu0 0.0
    %417 = vmatpush1.xpose.msra.mxu0 0.0
    %418 = vmatprep.mubr.f32.mxu0 %v135
    %419 = vmatmul.mubr.f32.gmra.mrb[0].mxu0 %v133
    %v420 = vpop.f32.mrb[0].mxu0
    %v421 = vadd.f32 %v351, %v420
    %v422 = vpop.f32.mrb[0].mxu0
    %423 = vdwg.mxu0
    %v424 = vadd.f32 %v65, %v421
    %vm425 = vcmask 254976
    %426 = vst.msk [vmem:[#allocation2] sm:$0x3] %vm425, %v424
    // Predicated region
    $region30: #{linear_leaky_relu.1} parent=1 // pred_check
      %p427 = pneg %p52
    $region31: #{linear_leaky_relu.1} parent=1 // pred_check_branch
      %429 = sbr.rel (%p427) target = $region33
    $region32: #{linear_leaky_relu.1} parent=1 // pred_region
      %v430 = vld [vmem:[#allocation2] sm:$0x3]
      %vm431 = vcmp.ge.f32.partialorder %v430, 0.0
      %v432 = vmul.f32 %v430, 0.2
      %v433 = vsel %vm431, %v430, %v432
      %434 = vst.msk [vmem:[#allocation9] sm:$0x3] %vm425, %v433
    $region33: #{linear_leaky_relu.1} parent=1 // pred_fallthru
      _
    // Predicated region
    $region34: #{linear_leaky_relu.1} parent=1 // pred_check
      _
    $region35: #{linear_leaky_relu.1} parent=1 // pred_check_branch
      %436 = sbr.rel (0) target = $region37
    $region36: #{linear_leaky_relu.1} parent=1 // pred_region
      %s438 = ssub.s32 32, 32
      %439 = vsyncadd [#allocation5], %s438
      %s441 = sshll.u32 [#allocation9], 4
      %s442 = int_to_ptr.vmem [resolvable:$true] %s441
      %444 = dma.vmem_to_hbm [thread:$0]  %s442, 32, %s3, [#allocation5]
    $region37: #{linear_leaky_relu.1} parent=1 // pred_fallthru
      _
    // Predicated region
    $region38: #{linear_leaky_relu.1} parent=1 // pred_check
      _
    $region39: #{linear_leaky_relu.1} parent=1 // pred_check_branch
      %446 = sbr.rel (0) target = $region41
    $region40: #{linear_leaky_relu.1} parent=1 // pred_region
      %447 = dma.done [#allocation5], 32
    $region41: #{linear_leaky_relu.1} parent=1 // pred_fallthru
      _
    %448 = vsyncpa [#allocation4], 1
    %449 = vsyncpa [#allocation7], 1
    %450 = vsyncpa [#allocation5], 1

</llo_original>
